<compile_context>
chip_gen: v5e
topology: v5e:2x2
jax: 0.10.0
libtpu: 0.0.40
codegen_flags: <defaults>
</compile_context>

<pallas_src>
import functools

import jax
import jax.numpy as jnp
from jax.experimental import pallas as pl
from jax.experimental.pallas import tpu as pltpu

_LANE = 128
_SUB = 8
_MAX_TM = 4096     # rows per tile -> 4096*128*4B = 2 MiB f32 input block


def _cdiv(a, b):
    return -(-a // b)


def _round_up(a, m):
    return _cdiv(a, m) * m


def _num_tensorcores():
    """Best-effort TensorCores-per-chip (2 on v7x, else 1). Never raises."""
    try:
        info = pltpu.get_tpu_info()
        for attr in ("num_cores", "num_tensorcores", "tensorcore_count",
                     "core_count", "cores_per_chip", "num_cores_per_chip"):
            v = getattr(info, attr, None)
            if isinstance(v, int) and 1 <= v <= 8:
                return v
    except Exception:
        pass
    try:
        kind = jax.devices()[0].device_kind.lower()
        if "v7" in kind:
            return 2
    except Exception:
        pass
    return 1


def _combined_loss_kernel(pred_ref, true_ref, sse_ref, sape_ref, *,
                          rows, tm, out_rows, total_tiles, epsilon, clip_mape,
                          has_ragged_edge, has_oob_tiles):
    c = pl.program_id(0)          # parallel (core) axis
    k = pl.program_id(1)          # reduction (row-tile) axis

    @pl.when(k == 0)
    def _():
        sse_ref[...] = jnp.zeros_like(sse_ref)
        sape_ref[...] = jnp.zeros_like(sape_ref)

    # Logical (unclamped) tile index.
    tile = c * pl.num_programs(1) + k

    def accumulate(p, t):
        diff = t - p
        sq_err = diff * diff
        # |diff| / (|t| + eps) via approximate EUP reciprocal (frees VALU).
        ape = jnp.abs(diff) * pl.reciprocal(jnp.abs(t) + epsilon, approx=True)
        ape = jnp.minimum(ape, clip_mape)
        # (tm,128) -> (tm/out_rows, out_rows, 128) -> sum axis 0: out_rows/8
        # independent (8,128) accumulation chains per quantity hide VALU
        # latency; accumulate into the resident per-core output block.
        sse_ref[...] += jnp.sum(
            sq_err.reshape(tm // out_rows, out_rows, _LANE), axis=0)
        sape_ref[...] += jnp.sum(
            ape.reshape(tm // out_rows, out_rows, _LANE), axis=0)

    def fast_path():
        # Interior tile: no masking at all (hot path).
        accumulate(pred_ref[...].astype(jnp.float32),
                   true_ref[...].astype(jnp.float32))

    def edge_path():
        # Ragged last tile: row-only mask.  OOB rows of the edge block can
        # hold arbitrary bits (Inf/NaN), so select BEFORE any arithmetic.
        row0 = tile * tm
        rids = jax.lax.broadcasted_iota(jnp.int32, (tm, _LANE), 0)
        valid = (row0 + rids) < rows
        p = jnp.where(valid, pred_ref[...].astype(jnp.float32), 0.0)
        t = jnp.where(valid, true_ref[...].astype(jnp.float32), 0.0)
        accumulate(p, t)

    if has_ragged_edge:
        edge_tile = total_tiles - 1

        @pl.when(tile < edge_tile)
        def _():
            fast_path()

        @pl.when(tile == edge_tile)
        def _():
            edge_path()
    elif has_oob_tiles:
        # Grid has (at most one) duplicate clamped tile past the end: skip it.
        @pl.when(tile < total_tiles)
        def _():
            fast_path()
    else:
        fast_path()


def combined_loss(y_pred, y_true, *, mse_weight=0.7, mape_weight=0.3,
                  epsilon=1e-8, clip_mape=100.0):
    """Pallas implementation of CombinedLoss.forward. Returns a scalar."""
    assert y_pred.shape == y_true.shape
    n = int(y_pred.size)
    assert n > 0

    # Flatten in the ORIGINAL dtype; cast to f32 happens inside the kernel.
    flat_p = jnp.ravel(y_pred)
    flat_t = jnp.ravel(y_true)

    # Only pad the sub-128 tail with zeros (zeros contribute exactly 0 to both
    # SSE and clipped APE, so no lane masking is needed in the kernel).
    pad = (-n) % _LANE
    if pad:
        flat_p = jnp.pad(flat_p, (0, pad))
        flat_t = jnp.pad(flat_t, (0, pad))

    rows = (n + pad) // _LANE
    P = flat_p.reshape(rows, _LANE)
    T = flat_t.reshape(rows, _LANE)

    n_cores = _num_tensorcores()
    itemsize = jnp.dtype(y_pred.dtype).itemsize
    # Round tile rows to the dtype's sublane packing (8 f32, 16 bf16, 32 i8).
    pack = max(_SUB, 32 // max(itemsize, 1))

    per_core_rows = _cdiv(rows, n_cores)
    tm = max(pack, min(_MAX_TM, _round_up(per_core_rows, pack)))

    # Independent-accumulation-chain count (output block rows).
    if tm % 32 == 0:
        out_rows = 32
    elif tm % 16 == 0:
        out_rows = 16
    else:
        out_rows = 8

    total_tiles = _cdiv(rows, tm)
    kb = _cdiv(total_tiles, n_cores)
    last_block = total_tiles - 1
    has_ragged_edge = (rows % tm) != 0
    has_oob_tiles = (n_cores * kb) > total_tiles

    def in_index_map(c, k):
        # Clamp so a fully out-of-range logical tile re-reads the last valid
        # block (its contribution is skipped inside the kernel).
        return (jnp.minimum(c * kb + k, last_block), 0)

    kernel = functools.partial(
        _combined_loss_kernel, rows=rows, tm=tm, out_rows=out_rows,
        total_tiles=total_tiles, epsilon=epsilon, clip_mape=clip_mape,
        has_ragged_edge=has_ragged_edge, has_oob_tiles=has_oob_tiles)

    cost = pl.CostEstimate(
        flops=9 * n,
        transcendentals=n,
        bytes_accessed=2 * n * itemsize + 2 * n_cores * out_rows * _LANE * 4,
    )

    sse_parts, sape_parts = pl.pallas_call(
        kernel,
        out_shape=(
            jax.ShapeDtypeStruct((n_cores * out_rows, _LANE), jnp.float32),
            jax.ShapeDtypeStruct((n_cores * out_rows, _LANE), jnp.float32),
        ),
        grid_spec=pltpu.PrefetchScalarGridSpec(
            num_scalar_prefetch=0,
            grid=(n_cores, kb),
            in_specs=[
                pl.BlockSpec((tm, _LANE), in_index_map),
                pl.BlockSpec((tm, _LANE), in_index_map),
            ],
            out_specs=[
                pl.BlockSpec((out_rows, _LANE), lambda c, k: (c, 0)),
                pl.BlockSpec((out_rows, _LANE), lambda c, k: (c, 0)),
            ],
        ),
        compiler_params=pltpu.CompilerParams(
            dimension_semantics=("parallel", "arbitrary"),
            vmem_limit_bytes=32 * 1024 * 1024,
        ),
        cost_estimate=cost,
    )(P, T)

    inv_n = 1.0 / float(n)
    mse = jnp.sum(sse_parts) * inv_n
    mape = (jnp.sum(sape_parts) * inv_n) * 100.0
    return mse_weight * mse + mape_weight * mape / 100.0


def _reference_loss(y_pred, y_true, mse_weight=0.7, mape_weight=0.3,
                    epsilon=1e-8, clip_mape=100.0):
    y_pred = y_pred.astype(jnp.float32)
    y_true = y_true.astype(jnp.float32)
    mse = jnp.mean((y_pred - y_true) ** 2)
    ape = jnp.abs((y_true - y_pred) / (jnp.abs(y_true) + epsilon))
    ape = jnp.minimum(ape, clip_mape)
    mape = jnp.mean(ape) * 100.0
    return mse_weight * mse + mape_weight * mape / 100.0


if __name__ == "__main__":
    key = jax.random.PRNGKey(0)
    k1, k2 = jax.random.split(key)

    # Small regression-style shapes: batch=2, channels=4, spatial=16x16.
    shape = (2, 4, 16, 16)
    y_true = jax.random.uniform(k1, shape, jnp.float32, minval=0.1, maxval=2.0)
    y_pred = y_true + 0.1 * jax.random.normal(k2, shape, jnp.float32)

    loss = jax.block_until_ready(combined_loss(y_pred, y_true))
    ref = jax.block_until_ready(_reference_loss(y_pred, y_true))
    # Tolerance relaxed vs v1: approx EUP reciprocal adds ~1e-4 relative error
    # to each APE term, washed out by the mean but not down to 1e-5.
    assert jnp.allclose(loss, ref, rtol=5e-3, atol=1e-5), (loss, ref)

    print("KERNEL_OK")
</pallas_src>

<mosaic_0001>
module attributes {stable_mosaic.version = 11 : i64} {
  func.func @_combined_loss_kernel(%arg0: i32, %arg1: i32, %arg2: memref<16x128xf32, #tpu.memory_space<vmem>>, %arg3: memref<16x128xf32, #tpu.memory_space<vmem>>, %arg4: memref<16x128xf32, #tpu.memory_space<vmem>>, %arg5: memref<16x128xf32, #tpu.memory_space<vmem>>) attributes {dimension_semantics = [#tpu.dimension_semantics<parallel>, #tpu.dimension_semantics<arbitrary>], iteration_bounds = array<i64: 1, 1>, scalar_prefetch = 0 : i64, scratch_operands = 0 : i64, tpu.core_type = #tpu.core_type<tc>, window_params = [{transform_indices = @transform_0, window_bounds = array<i64: 16, 128>}, {transform_indices = @transform_1, window_bounds = array<i64: 16, 128>}, {transform_indices = @transform_2, window_bounds = array<i64: 16, 128>}, {transform_indices = @transform_3, window_bounds = array<i64: 16, 128>}]} {
    %c0_i32 = arith.constant 0 : i32
    %0 = arith.cmpi eq, %arg1, %c0_i32 : i32
    %1 = arith.extui %0 : i1 to i32
    %c0_i32_0 = arith.constant 0 : i32
    %2 = arith.cmpi ne, %1, %c0_i32_0 : i32
    scf.if %2 {
      %cst_15 = arith.constant 0.000000e+00 : f32
      %25 = vector.broadcast %cst_15 : f32 to vector<16x128xf32>
      %c0_16 = arith.constant 0 : index
      %c0_17 = arith.constant 0 : index
      %26 = vector.load %arg4[%c0_16, %c0_17] : memref<16x128xf32, #tpu.memory_space<vmem>>, vector<16x128xf32>
      tpu.vector_store %arg4[%c0_16, %c0_17], %25 {strides = array<i32>} : memref<16x128xf32, #tpu.memory_space<vmem>>, vector<16x128xf32>,
      %cst_18 = arith.constant 0.000000e+00 : f32
      %27 = vector.broadcast %cst_18 : f32 to vector<16x128xf32>
      %c0_19 = arith.constant 0 : index
      %c0_20 = arith.constant 0 : index
      %28 = vector.load %arg5[%c0_19, %c0_20] : memref<16x128xf32, #tpu.memory_space<vmem>>, vector<16x128xf32>
      tpu.vector_store %arg5[%c0_19, %c0_20], %27 {strides = array<i32>} : memref<16x128xf32, #tpu.memory_space<vmem>>, vector<16x128xf32>,
    } else {
    }
    %c0 = arith.constant 0 : index
    %c0_1 = arith.constant 0 : index
    %3 = vector.load %arg2[%c0, %c0_1] : memref<16x128xf32, #tpu.memory_space<vmem>>, vector<16x128xf32>
    %c0_2 = arith.constant 0 : index
    %c0_3 = arith.constant 0 : index
    %4 = vector.load %arg3[%c0_2, %c0_3] : memref<16x128xf32, #tpu.memory_space<vmem>>, vector<16x128xf32>
    %5 = arith.subf %4, %3 : vector<16x128xf32>
    %6 = arith.mulf %5, %5 : vector<16x128xf32>
    %7 = math.absf %5 : vector<16x128xf32>
    %8 = math.absf %4 : vector<16x128xf32>
    %cst = arith.constant 9.99999993E-9 : f32
    %9 = vector.broadcast %cst : f32 to vector<16x128xf32>
    %10 = arith.addf %8, %9 : vector<16x128xf32>
    %11 = tpu.reciprocal %10 {approx = true} : vector<16x128xf32> -> vector<16x128xf32>
    %12 = arith.mulf %7, %11 : vector<16x128xf32>
    %cst_4 = arith.constant 1.000000e+02 : f32
    %13 = vector.broadcast %cst_4 : f32 to vector<16x128xf32>
    %14 = arith.minimumf %12, %13 : vector<16x128xf32>
    %c0_5 = arith.constant 0 : index
    %c0_6 = arith.constant 0 : index
    %15 = vector.load %arg4[%c0_5, %c0_6] : memref<16x128xf32, #tpu.memory_space<vmem>>, vector<16x128xf32>
    %16 = vector.shape_cast %6 : vector<16x128xf32> to vector<1x16x128xf32>
    %cst_7 = arith.constant dense<0.000000e+00> : vector<16x128xf32>
    %17 = vector.multi_reduction <add>, %16, %cst_7 [0] : vector<1x16x128xf32> to vector<16x128xf32>
    %18 = arith.addf %15, %17 : vector<16x128xf32>
    %c0_8 = arith.constant 0 : index
    %c0_9 = arith.constant 0 : index
    %19 = vector.load %arg4[%c0_8, %c0_9] : memref<16x128xf32, #tpu.memory_space<vmem>>, vector<16x128xf32>
    tpu.vector_store %arg4[%c0_8, %c0_9], %18 {strides = array<i32>} : memref<16x128xf32, #tpu.memory_space<vmem>>, vector<16x128xf32>,
    %c0_10 = arith.constant 0 : index
    %c0_11 = arith.constant 0 : index
    %20 = vector.load %arg5[%c0_10, %c0_11] : memref<16x128xf32, #tpu.memory_space<vmem>>, vector<16x128xf32>
    %21 = vector.shape_cast %14 : vector<16x128xf32> to vector<1x16x128xf32>
    %cst_12 = arith.constant dense<0.000000e+00> : vector<16x128xf32>
    %22 = vector.multi_reduction <add>, %21, %cst_12 [0] : vector<1x16x128xf32> to vector<16x128xf32>
    %23 = arith.addf %20, %22 : vector<16x128xf32>
    %c0_13 = arith.constant 0 : index
    %c0_14 = arith.constant 0 : index
    %24 = vector.load %arg5[%c0_13, %c0_14] : memref<16x128xf32, #tpu.memory_space<vmem>>, vector<16x128xf32>
    tpu.vector_store %arg5[%c0_13, %c0_14], %23 {strides = array<i32>} : memref<16x128xf32, #tpu.memory_space<vmem>>, vector<16x128xf32>,
    return
  }
  func.func @transform_0(%arg0: i32, %arg1: i32) -> (i32, i32) {
    %c1_i32 = arith.constant 1 : i32
    %0 = arith.muli %arg0, %c1_i32 : i32
    %1 = arith.addi %0, %arg1 : i32
    %c0_i32 = arith.constant 0 : i32
    %2 = arith.minsi %1, %c0_i32 : i32
    %c0_i32_0 = arith.constant 0 : i32
    %c0_i32_1 = arith.constant 0 : i32
    return %2, %c0_i32_0 : i32, i32
  }
  func.func @transform_1(%arg0: i32, %arg1: i32) -> (i32, i32) {
    %c1_i32 = arith.constant 1 : i32
    %0 = arith.muli %arg0, %c1_i32 : i32
    %1 = arith.addi %0, %arg1 : i32
    %c0_i32 = arith.constant 0 : i32
    %2 = arith.minsi %1, %c0_i32 : i32
    %c0_i32_0 = arith.constant 0 : i32
    %c0_i32_1 = arith.constant 0 : i32
    return %2, %c0_i32_0 : i32, i32
  }
  func.func @transform_2(%arg0: i32, %arg1: i32) -> (i32, i32) {
    %c0_i32 = arith.constant 0 : i32
    %c0_i32_0 = arith.constant 0 : i32
    return %arg0, %c0_i32 : i32, i32
  }
  func.func @transform_3(%arg0: i32, %arg1: i32) -> (i32, i32) {
    %c0_i32 = arith.constant 0 : i32
    %c0_i32_0 = arith.constant 0 : i32
    return %arg0, %c0_i32 : i32, i32
  }
}

</mosaic_0001>

<llo_original>
// kernel: tpu_custom_call.1
$region0: #{tpu_custom_call.1}
  #allocation0 [shape = 'u32[]', space=smem, size = 0x4, offset = 0x4, fixed_abs, tag = 'smem constant byte address 0x4 - core index']
  #allocation1 [shape = 'u32[72,128]{1,0:T(1,128)}', space=vmem, size = 0x9000, scoped, tag = 'internal scratch']
  %s0 = inlined_call_operand.hbm [shape: f32[16,128], index: 0, kind: input, shape index: {}]
  %s1 = inlined_call_operand.hbm [shape: f32[16,128], index: 1, kind: input, shape index: {}]
  %s2 = inlined_call_operand.hbm [shape: f32[16,128], index: 2, kind: output, shape index: {0}]
  %s3 = inlined_call_operand.hbm [shape: f32[16,128], index: 3, kind: output, shape index: {1}]
  %4 = xla_tuple %s2, %s3
  %s5 = sld [smem:[#allocation0]]
  $region38: #{tpu_custom_call.1} parent=0
    _
  %s7 = ssub.s32 1, %s5
  %s8 = scalar_select 0, %s7, %s5
  $region1: #{tpu_custom_call.1} parent=0
    #allocation2 [shape = 'u8[8192]{0}', space=vmem, size = 0x2000, scoped, tag = 'input window, operand 0, single buffered']
    #allocation3 [shape = 's32[1]{0}', space=sflag, size = 0x4, scoped, tag = 'scoped memory for tpu_custom_call.1']
    #allocation4 [shape = 's32[1]{0}', space=sflag, size = 0x4, scoped, tag = 'scoped memory for tpu_custom_call.1']
    #allocation5 [shape = 'u8[8192]{0}', space=vmem, size = 0x2000, scoped, tag = 'input window, operand 1, single buffered']
    #allocation6 [shape = 's32[1]{0}', space=sflag, size = 0x4, scoped, tag = 'scoped memory for tpu_custom_call.1']
    #allocation7 [shape = 'u8[8192]{0}', space=vmem, size = 0x2000, scoped, tag = 'output window, operand 0, single buffered']
    #allocation8 [shape = 'u8[8192]{0}', space=vmem, size = 0x2000, scoped, tag = 'output window, operand 1, single buffered']
    #allocation9 [shape = 's32[1]{0}', space=sflag, size = 0x4, scoped, tag = 'scoped memory for tpu_custom_call.1']
    %9 = vsyncpa [#allocation3], 0
    %10 = vsyncpa [#allocation6], 0
    %11 = vsyncpa [#allocation4], 0
    %12 = vsyncpa [#allocation9], 0
    // Predicated region
    $region2: #{tpu_custom_call.1} parent=1 // pred_check
      _
    $region3: #{tpu_custom_call.1} parent=1 // pred_check_branch
      %14 = sbr.rel (0) target = $region5
    $region4: #{tpu_custom_call.1} parent=1 // pred_region
      %s15 = sadd.s32 0, 0
      %p16 = scmp.lt.s32.totalorder %s15, 0
      %s17 = scalar_select %p16, %s15, 0
      %s18 = smul.u32 2, %s17
      %20 = vsyncadd [#allocation3], 0
      %s21 = smul.addr %s18, 8
      %s22 = scalar_lea.hbm %s0, %s21
      %s23 = sshll.u32 %s22, 4
      %s24 = int_to_ptr.hbm [resolvable:$true] %s23
      %s25 = sshll.u32 [#allocation2], 4
      %s26 = int_to_ptr.vmem [resolvable:$true] %s25
      %31 = dma.hbm_to_vmem [thread:$0]  %s24, 256, %s26, [#allocation3], 128, 128, 8
    $region5: #{tpu_custom_call.1} parent=1 // pred_fallthru
      _
    // Predicated region
    $region6: #{tpu_custom_call.1} parent=1 // pred_check
      _
    $region7: #{tpu_custom_call.1} parent=1 // pred_check_branch
      %33 = sbr.rel (0) target = $region9
    $region8: #{tpu_custom_call.1} parent=1 // pred_region
      %s34 = sadd.s32 0, 0
      %p35 = scmp.lt.s32.totalorder %s34, 0
      %s36 = scalar_select %p35, %s34, 0
      %s37 = smul.u32 2, %s36
      %39 = vsyncadd [#allocation6], 0
      %s40 = smul.addr %s37, 8
      %s41 = scalar_lea.hbm %s1, %s40
      %s42 = sshll.u32 %s41, 4
      %s43 = int_to_ptr.hbm [resolvable:$true] %s42
      %s44 = sshll.u32 [#allocation5], 4
      %s45 = int_to_ptr.vmem [resolvable:$true] %s44
      %50 = dma.hbm_to_vmem [thread:$0]  %s43, 256, %s45, [#allocation6], 128, 128, 8
    $region9: #{tpu_custom_call.1} parent=1 // pred_fallthru
      _
    // Predicated region
    $region10: #{tpu_custom_call.1} parent=1 // pred_check
      _
    $region11: #{tpu_custom_call.1} parent=1 // pred_check_branch
      %52 = sbr.rel (0) target = $region13
    $region12: #{tpu_custom_call.1} parent=1 // pred_region
      %54 = dma.done [#allocation3], 256
    $region13: #{tpu_custom_call.1} parent=1 // pred_fallthru
      _
    // Predicated region
    $region14: #{tpu_custom_call.1} parent=1 // pred_check
      _
    $region15: #{tpu_custom_call.1} parent=1 // pred_check_branch
      %56 = sbr.rel (0) target = $region17
    $region16: #{tpu_custom_call.1} parent=1 // pred_region
      %58 = dma.done [#allocation6], 256
    $region17: #{tpu_custom_call.1} parent=1 // pred_fallthru
      _
    %s59 = sadd.s32 0, 0
    %p60 = scmp.lt.s32.totalorder %s59, 0
    %s61 = scalar_select %p60, %s59, 0
    %s62 = smul.u32 2, %s61
    %s63 = sadd.s32 0, 0
    %p64 = scmp.lt.s32.totalorder %s63, 0
    %s65 = scalar_select %p64, %s63, 0
    %s66 = smul.u32 2, %s65
    %p67 = scmp.eq.s32.totalorder 0, 0
    // Predicated region
    $region18: #{tpu_custom_call.1} parent=1 // pred_check
      %p68 = pneg %p67
    $region19: #{tpu_custom_call.1} parent=1 // pred_check_branch
      %70 = sbr.rel (%p68) target = $region21
    $region20: #{tpu_custom_call.1} parent=1 // pred_region
      %71 = vst [vmem:[#allocation7] sm:$0xff] 0.0
      %72 = vst [vmem:[#allocation7 + $0x8] sm:$0xff] 0.0
      %73 = vst [vmem:[#allocation8] sm:$0xff] 0.0
      %74 = vst [vmem:[#allocation8 + $0x8] sm:$0xff] 0.0
    $region21: #{tpu_custom_call.1} parent=1 // pred_fallthru
      _
    %v75 = vld [vmem:[#allocation2] sm:$0xff]
    %v76 = vld [vmem:[#allocation2 + $0x8] sm:$0xff]
    %v77 = vld [vmem:[#allocation5] sm:$0xff]
    %v78 = vld [vmem:[#allocation5 + $0x8] sm:$0xff]
    %v79 = vsub.f32 %v77, %v75
    %v80 = vsub.f32 %v78, %v76
    %v81 = vmul.f32 %v79, %v79
    %v82 = vmul.f32 %v80, %v80
    %v83 = vand.u32 2147483647, %v79
    %v84 = vand.u32 2147483647, %v80
    %v85 = vand.u32 2147483647, %v77
    %v86 = vand.u32 2147483647, %v78
    %v87 = vadd.f32 %v85, 1e-08
    %v88 = vadd.f32 %v86, 1e-08
    %v89 = vrcp.pop %v87
    %v90 = vrcp.pop %v88
    %v91 = vmul.f32 %v83, %v89
    %v92 = vmul.f32 %v84, %v90
    %v93 = vmin.f32 %v91, 100.0
    %v94 = vmin.f32 %v92, 100.0
    %v95 = vld [vmem:[#allocation7] sm:$0xff]
    %v96 = vld [vmem:[#allocation7 + $0x8] sm:$0xff]
    %v97 = vadd.f32 %v81, 0.0
    %v98 = vadd.f32 %v82, 0.0
    %v99 = vadd.f32 %v95, %v97
    %v100 = vadd.f32 %v96, %v98
    %101 = vst [vmem:[#allocation7] sm:$0xff] %v99
    %102 = vst [vmem:[#allocation7 + $0x8] sm:$0xff] %v100
    %v103 = vld [vmem:[#allocation8] sm:$0xff]
    %v104 = vld [vmem:[#allocation8 + $0x8] sm:$0xff]
    %v105 = vadd.f32 %v93, 0.0
    %v106 = vadd.f32 %v94, 0.0
    %v107 = vadd.f32 %v103, %v105
    %v108 = vadd.f32 %v104, %v106
    %109 = vst [vmem:[#allocation8] sm:$0xff] %v107
    %110 = vst [vmem:[#allocation8 + $0x8] sm:$0xff] %v108
    // Predicated region
    $region22: #{tpu_custom_call.1} parent=1 // pred_check
      _
    $region23: #{tpu_custom_call.1} parent=1 // pred_check_branch
      %112 = sbr.rel (0) target = $region25
    $region24: #{tpu_custom_call.1} parent=1 // pred_region
      %114 = vsyncadd [#allocation4], 0
      %s115 = sshll.u32 [#allocation7], 4
      %s116 = int_to_ptr.vmem [resolvable:$true] %s115
      %s117 = sshll.u32 %s2, 4
      %s118 = int_to_ptr.hbm [resolvable:$true] %s117
      %123 = dma.vmem_to_hbm [thread:$0]  %s116, 256, %s118, [#allocation4], 128, 128, 8
    $region25: #{tpu_custom_call.1} parent=1 // pred_fallthru
      _
    // Predicated region
    $region26: #{tpu_custom_call.1} parent=1 // pred_check
      _
    $region27: #{tpu_custom_call.1} parent=1 // pred_check_branch
      %125 = sbr.rel (0) target = $region29
    $region28: #{tpu_custom_call.1} parent=1 // pred_region
      %127 = vsyncadd [#allocation9], 0
      %s128 = sshll.u32 [#allocation8], 4
      %s129 = int_to_ptr.vmem [resolvable:$true] %s128
      %s130 = sshll.u32 %s3, 4
      %s131 = int_to_ptr.hbm [resolvable:$true] %s130
      %136 = dma.vmem_to_hbm [thread:$0]  %s129, 256, %s131, [#allocation9], 128, 128, 8
    $region29: #{tpu_custom_call.1} parent=1 // pred_fallthru
      _
    // Predicated region
    $region30: #{tpu_custom_call.1} parent=1 // pred_check
      _
    $region31: #{tpu_custom_call.1} parent=1 // pred_check_branch
      %138 = sbr.rel (0) target = $region33
    $region32: #{tpu_custom_call.1} parent=1 // pred_region
      %140 = dma.done [#allocation4], 256
    $region33: #{tpu_custom_call.1} parent=1 // pred_fallthru
      _
    // Predicated region
    $region34: #{tpu_custom_call.1} parent=1 // pred_check
      _
    $region35: #{tpu_custom_call.1} parent=1 // pred_check_branch
      %142 = sbr.rel (0) target = $region37
    $region36: #{tpu_custom_call.1} parent=1 // pred_region
      %144 = dma.done [#allocation9], 256
    $region37: #{tpu_custom_call.1} parent=1 // pred_fallthru
      _
    %145 = vsyncpa [#allocation3], 1
    %146 = vsyncpa [#allocation6], 1
    %147 = vsyncpa [#allocation4], 1
    %148 = vsyncpa [#allocation9], 1

</llo_original>
